<compile_context>
chip_gen: v6e
topology: v6e:2x2x1
jax: 0.10.0
libtpu: 0.0.40
codegen_flags: <defaults>
</compile_context>

<pallas_src>
import functools

import jax
import jax.numpy as jnp
from jax.experimental import pallas as pl
from jax.experimental.pallas import tpu as pltpu


# ----------------------------------------------------------------------------
# Pallas kernel: one env, one batch tile.
#   xr_ref / xi_ref : (tb, 1, I, M)  real / imag spectral activations (M on lanes)
#   wr_ref / wi_ref : (1, I, O, M)   lam-blended per-env complex weights
#   yr_ref / yi_ref : (tb, 1, O, M)  real / imag outputs
# ----------------------------------------------------------------------------
def spectral_mix_kernel(xr_ref, xi_ref, wr_ref, wi_ref, yr_ref, yi_ref):
    xr = xr_ref[:, 0]          # (tb, I, M)
    xi = xi_ref[:, 0]
    wr = wr_ref[0]             # (I, O, M)
    wi = wi_ref[0]
    in_ch = wr.shape[0]

    acc_r = None
    acc_i = None
    # Channel counts are tiny: an unrolled VPU FMA loop with M dense on the
    # lane axis beats M starved tiny MXU matmuls.
    for i in range(in_ch):
        xr_i = xr[:, i:i + 1, :]     # (tb, 1, M)  -> sublane-broadcast over O
        xi_i = xi[:, i:i + 1, :]
        wr_i = wr[i:i + 1]           # (1, O, M)   -> major-broadcast over tb
        wi_i = wi[i:i + 1]
        tr = xr_i * wr_i - xi_i * wi_i   # (tb, O, M)
        ti = xr_i * wi_i + xi_i * wr_i
        acc_r = tr if acc_r is None else acc_r + tr
        acc_i = ti if acc_i is None else acc_i + ti

    yr_ref[:, 0] = acc_r
    yi_ref[:, 0] = acc_i


# ----------------------------------------------------------------------------
# Tiling / VMEM sizing helpers.
# ----------------------------------------------------------------------------
def _pad_to(n, m):
    return ((n + m - 1) // m) * m


def _vmem_limit_and_budget():
    try:
        cap = int(pltpu.get_tpu_info().vmem_capacity_bytes)
    except Exception:  # query unavailable -> assume the smallest (v7x) VMEM
        cap = 64 * 1024 * 1024
    # Stay well under physical VMEM so double-buffering survives:
    # ~96 MiB limit on 128 MiB parts (v5e/v6e), ~48 MiB on 64 MiB parts (v7x).
    limit = max(32 * 1024 * 1024, min(int(cap * 0.75), 100 * 1024 * 1024))
    budget = limit // 2  # headroom for compiler-internal scratch & temporaries
    return limit, budget


def _divisors_desc(n):
    ds = set()
    i = 1
    while i * i <= n:
        if n % i == 0:
            ds.add(i)
            ds.add(n // i)
        i += 1
    return sorted(ds, reverse=True)


def _pick_batch_tile(B, E, I, O, M, budget_bytes):
    """Largest batch tile whose double-buffered working set fits the budget."""
    lane_m = _pad_to(M, 128)

    def working_set(tb):
        x_blk = tb * _pad_to(I, 8) * lane_m * 4        # one of xr / xi
        y_blk = tb * _pad_to(O, 8) * lane_m * 4        # one of yr / yi
        w_blk = I * _pad_to(O, 8) * lane_m * 4         # one of wr / wi
        dbuf = 2 * (2 * x_blk + 2 * y_blk + 2 * w_blk)  # double-buffered blocks
        live = 2 * y_blk                                # in-kernel accumulators
        return dbuf + live

    fitting = [d for d in _divisors_desc(B) if working_set(d) <= budget_bytes]
    if not fitting:
        return 1
    tb = fitting[0]                       # largest fitting divisor
    mid = [d for d in fitting if 256 <= d <= 1024]
    if tb > 1024 and mid:                 # bound in-kernel live ranges
        tb = max(mid)
    # v7x megacore balance: prefer an even total number of grid steps when it
    # does not shrink the batch tile below 256 rows.
    if (E * (B // tb)) % 2 == 1 and tb % 2 == 0 and tb // 2 >= 256:
        tb //= 2
    return tb


def _spectral_mix_pallas(xr, xi, wr, wi):
    B, E, I, M = xr.shape
    O = wr.shape[2]
    limit_bytes, budget_bytes = _vmem_limit_and_budget()
    tb = _pick_batch_tile(B, E, I, O, M, budget_bytes)
    grid = (E, B // tb)

    x_spec = pl.BlockSpec((tb, 1, I, M), lambda e, b: (b, e, 0, 0))
    w_spec = pl.BlockSpec((1, I, O, M), lambda e, b: (e, 0, 0, 0))
    y_spec = pl.BlockSpec((tb, 1, O, M), lambda e, b: (b, e, 0, 0))

    out_shape = (jax.ShapeDtypeStruct((B, E, O, M), jnp.float32),
                 jax.ShapeDtypeStruct((B, E, O, M), jnp.float32))

    return pl.pallas_call(
        spectral_mix_kernel,
        out_shape=out_shape,
        grid_spec=pltpu.PrefetchScalarGridSpec(
            num_scalar_prefetch=0,
            grid=grid,
            in_specs=[x_spec, x_spec, w_spec, w_spec],
            out_specs=[y_spec, y_spec],
        ),
        compiler_params=pltpu.CompilerParams(
            dimension_semantics=("parallel", "parallel"),
            vmem_limit_bytes=limit_bytes,
        ),
    )(xr, xi, wr, wi)


# ----------------------------------------------------------------------------
# Full forward pass (glue: FFT, env-weight build, exact lam pre-blend, iFFT).
# Matches GroupSpectralConv1d.forward exactly.
# ----------------------------------------------------------------------------
@functools.partial(jax.jit,
                   static_argnames=("in_ch", "out_ch", "code_ch", "n_env", "modes1"))
def group_spectral_conv1d(x, codes, com_w, code_w, filt_w,
                          *, in_ch, out_ch, code_ch, n_env, modes1):
    B, _, L = x.shape
    Lh = L // 2 + 1
    hi = jax.lax.Precision.HIGHEST

    # ---- spectral transform (glue) ----
    x_ft = jnp.fft.rfft(x, axis=-1).reshape(B, n_env, in_ch, Lh)
    xm = x_ft[..., :modes1]
    xr = jnp.real(xm).astype(jnp.float32)          # (B, E, I, M)  natural layout
    xi = jnp.imag(xm).astype(jnp.float32)

    # ---- weight prep (glue): env weights, exact lam pre-blend ----
    # hardsigmoid(w) = clip(w/6 + 0.5, 0, 1)
    lam = jnp.clip(filt_w / 6.0 + 0.5, 0.0, 1.0).astype(jnp.float32)      # (M,)
    code_w_r = code_w.reshape(code_ch, in_ch, out_ch, modes1, 2)
    env_w = jnp.einsum("ec,cioxy->eioxy", codes, code_w_r, precision=hi)  # (E,I,O,M,2)
    wr = lam * com_w[None, ..., 0] + (1.0 - lam) * env_w[..., 0]          # (E,I,O,M)
    wi = lam * com_w[None, ..., 1] + (1.0 - lam) * env_w[..., 1]

    # ---- Pallas kernel: per-env complex channel mix, M on lanes ----
    yr, yi = _spectral_mix_pallas(xr, xi, wr, wi)  # (B, E, O, M) each

    out_ft = jnp.zeros((B, n_env, out_ch, Lh), dtype=jnp.complex64)
    out_ft = out_ft.at[..., :modes1].set(yr + 1j * yi)
    out_ft = out_ft.reshape(B, n_env * out_ch, Lh)
    return jnp.fft.irfft(out_ft, n=L, axis=-1)


# ----------------------------------------------------------------------------
# Pure-JAX reference matching the PyTorch module exactly.
# ----------------------------------------------------------------------------
def reference(x, codes, com_w, code_w, filt_w, *, in_ch, out_ch, code_ch, n_env, modes1):
    hi = jax.lax.Precision.HIGHEST
    B, _, L = x.shape
    Lh = L // 2 + 1
    x_ft = jnp.fft.rfft(x, axis=-1).reshape(B, n_env, in_ch, Lh)
    lam = jnp.clip(filt_w / 6.0 + 0.5, 0.0, 1.0)
    cw = com_w[..., 0] + 1j * com_w[..., 1]
    code_w_r = code_w.reshape(code_ch, in_ch, out_ch, modes1, 2)
    env = jnp.einsum("ec,cioxy->eioxy", codes, code_w_r, precision=hi)
    ew = env[..., 0] + 1j * env[..., 1]
    xm = x_ft[..., :modes1]
    out = lam * jnp.einsum("beix,iox->beox", xm, cw, precision=hi) \
        + (1.0 - lam) * jnp.einsum("beix,eiox->beox", xm, ew, precision=hi)
    out_ft = jnp.zeros((B, n_env, out_ch, Lh), dtype=jnp.complex64)
    out_ft = out_ft.at[..., :modes1].set(out)
    out_ft = out_ft.reshape(B, n_env * out_ch, Lh)
    return jnp.fft.irfft(out_ft, n=L, axis=-1)


if __name__ == "__main__":
    # Small synthetic config consistent with the module's forward:
    #   x: (batch, n_env*in_channels, L), codes: (n_env, code_channels)
    batch, n_env, in_ch, out_ch, code_ch, modes1, L = 2, 3, 3, 3, 4, 8, 20
    scale = 1.0 / (in_ch * out_ch)

    key = jax.random.PRNGKey(0)
    k1, k2, k3, k4, k5 = jax.random.split(key, 5)

    x = jax.random.normal(k1, (batch, n_env * in_ch, L), dtype=jnp.float32)
    codes = jax.random.normal(k2, (n_env, code_ch), dtype=jnp.float32)

    # Parameters (shapes per __init__). com/code weights ~ scale*U[0,1).
    com_w = scale * jax.random.uniform(k3, (in_ch, out_ch, modes1, 2), dtype=jnp.float32)
    code_w = scale * jax.random.uniform(k4, (code_ch * in_ch, out_ch, modes1, 2), dtype=jnp.float32)
    # Module init is -3.0*ones (=> lam==0); use random values so both the
    # "com" and "env" contributions of the blended weight are exercised.
    filt_w = jax.random.uniform(k5, (modes1,), minval=-3.0, maxval=3.0, dtype=jnp.float32)

    out = group_spectral_conv1d(x, codes, com_w, code_w, filt_w,
                                in_ch=in_ch, out_ch=out_ch, code_ch=code_ch,
                                n_env=n_env, modes1=modes1)
    out = jax.block_until_ready(out)

    ref = reference(x, codes, com_w, code_w, filt_w,
                    in_ch=in_ch, out_ch=out_ch, code_ch=code_ch,
                    n_env=n_env, modes1=modes1)
    ref = jax.block_until_ready(ref)

    assert out.shape == (batch, n_env * out_ch, L), out.shape
    # Pure-VPU f32 path (no MXU rounding) -> tight tolerance.
    assert jnp.allclose(out, ref, rtol=1e-4, atol=1e-4), float(jnp.max(jnp.abs(out - ref)))
    print("KERNEL_OK")
</pallas_src>

<mosaic_0001>
module attributes {stable_mosaic.version = 11 : i64} {
  func.func @spectral_mix_kernel(%arg0: i32, %arg1: i32, %arg2: memref<2x1x3x8xf32, #tpu.memory_space<vmem>>, %arg3: memref<2x1x3x8xf32, #tpu.memory_space<vmem>>, %arg4: memref<1x3x3x8xf32, #tpu.memory_space<vmem>>, %arg5: memref<1x3x3x8xf32, #tpu.memory_space<vmem>>, %arg6: memref<2x1x3x8xf32, #tpu.memory_space<vmem>>, %arg7: memref<2x1x3x8xf32, #tpu.memory_space<vmem>>) attributes {dimension_semantics = [#tpu.dimension_semantics<parallel>, #tpu.dimension_semantics<parallel>], iteration_bounds = array<i64: 3, 1>, scalar_prefetch = 0 : i64, scratch_operands = 0 : i64, tpu.core_type = #tpu.core_type<tc>, window_params = [{transform_indices = @transform_0, window_bounds = array<i64: 2, 1, 3, 8>}, {transform_indices = @transform_1, window_bounds = array<i64: 2, 1, 3, 8>}, {transform_indices = @transform_2, window_bounds = array<i64: 1, 3, 3, 8>}, {transform_indices = @transform_3, window_bounds = array<i64: 1, 3, 3, 8>}, {transform_indices = @transform_4, window_bounds = array<i64: 2, 1, 3, 8>}, {transform_indices = @transform_5, window_bounds = array<i64: 2, 1, 3, 8>}]} {
    %c0 = arith.constant 0 : index
    %c0_0 = arith.constant 0 : index
    %c0_1 = arith.constant 0 : index
    %c0_2 = arith.constant 0 : index
    %0 = vector.load %arg2[%c0, %c0_0, %c0_1, %c0_2] : memref<2x1x3x8xf32, #tpu.memory_space<vmem>>, vector<2x1x3x8xf32>
    %1 = vector.shape_cast %0 : vector<2x1x3x8xf32> to vector<2x3x8xf32>
    %c0_3 = arith.constant 0 : index
    %c0_4 = arith.constant 0 : index
    %c0_5 = arith.constant 0 : index
    %c0_6 = arith.constant 0 : index
    %2 = vector.load %arg3[%c0_3, %c0_4, %c0_5, %c0_6] : memref<2x1x3x8xf32, #tpu.memory_space<vmem>>, vector<2x1x3x8xf32>
    %3 = vector.shape_cast %2 : vector<2x1x3x8xf32> to vector<2x3x8xf32>
    %c0_7 = arith.constant 0 : index
    %c0_8 = arith.constant 0 : index
    %c0_9 = arith.constant 0 : index
    %c0_10 = arith.constant 0 : index
    %4 = vector.load %arg4[%c0_7, %c0_8, %c0_9, %c0_10] : memref<1x3x3x8xf32, #tpu.memory_space<vmem>>, vector<1x3x3x8xf32>
    %5 = vector.shape_cast %4 : vector<1x3x3x8xf32> to vector<3x3x8xf32>
    %c0_11 = arith.constant 0 : index
    %c0_12 = arith.constant 0 : index
    %c0_13 = arith.constant 0 : index
    %c0_14 = arith.constant 0 : index
    %6 = vector.load %arg5[%c0_11, %c0_12, %c0_13, %c0_14] : memref<1x3x3x8xf32, #tpu.memory_space<vmem>>, vector<1x3x3x8xf32>
    %7 = vector.shape_cast %6 : vector<1x3x3x8xf32> to vector<3x3x8xf32>
    %8 = vector.extract_strided_slice %1 {offsets = [0, 0, 0], sizes = [2, 1, 8], strides = [1, 1, 1]} : vector<2x3x8xf32> to vector<2x1x8xf32>
    %9 = vector.extract_strided_slice %3 {offsets = [0, 0, 0], sizes = [2, 1, 8], strides = [1, 1, 1]} : vector<2x3x8xf32> to vector<2x1x8xf32>
    %10 = vector.extract_strided_slice %5 {offsets = [0, 0, 0], sizes = [1, 3, 8], strides = [1, 1, 1]} : vector<3x3x8xf32> to vector<1x3x8xf32>
    %11 = vector.extract_strided_slice %7 {offsets = [0, 0, 0], sizes = [1, 3, 8], strides = [1, 1, 1]} : vector<3x3x8xf32> to vector<1x3x8xf32>
    %12 = vector.broadcast %8 : vector<2x1x8xf32> to vector<2x3x8xf32>
    %13 = vector.broadcast %10 : vector<1x3x8xf32> to vector<2x3x8xf32>
    %14 = arith.mulf %12, %13 : vector<2x3x8xf32>
    %15 = vector.broadcast %9 : vector<2x1x8xf32> to vector<2x3x8xf32>
    %16 = vector.broadcast %11 : vector<1x3x8xf32> to vector<2x3x8xf32>
    %17 = arith.mulf %15, %16 : vector<2x3x8xf32>
    %18 = arith.subf %14, %17 : vector<2x3x8xf32>
    %19 = vector.broadcast %8 : vector<2x1x8xf32> to vector<2x3x8xf32>
    %20 = vector.broadcast %11 : vector<1x3x8xf32> to vector<2x3x8xf32>
    %21 = arith.mulf %19, %20 : vector<2x3x8xf32>
    %22 = vector.broadcast %9 : vector<2x1x8xf32> to vector<2x3x8xf32>
    %23 = vector.broadcast %10 : vector<1x3x8xf32> to vector<2x3x8xf32>
    %24 = arith.mulf %22, %23 : vector<2x3x8xf32>
    %25 = arith.addf %21, %24 : vector<2x3x8xf32>
    %26 = vector.extract_strided_slice %1 {offsets = [0, 1, 0], sizes = [2, 1, 8], strides = [1, 1, 1]} : vector<2x3x8xf32> to vector<2x1x8xf32>
    %27 = vector.extract_strided_slice %3 {offsets = [0, 1, 0], sizes = [2, 1, 8], strides = [1, 1, 1]} : vector<2x3x8xf32> to vector<2x1x8xf32>
    %28 = vector.extract_strided_slice %5 {offsets = [1, 0, 0], sizes = [1, 3, 8], strides = [1, 1, 1]} : vector<3x3x8xf32> to vector<1x3x8xf32>
    %29 = vector.extract_strided_slice %7 {offsets = [1, 0, 0], sizes = [1, 3, 8], strides = [1, 1, 1]} : vector<3x3x8xf32> to vector<1x3x8xf32>
    %30 = vector.broadcast %26 : vector<2x1x8xf32> to vector<2x3x8xf32>
    %31 = vector.broadcast %28 : vector<1x3x8xf32> to vector<2x3x8xf32>
    %32 = arith.mulf %30, %31 : vector<2x3x8xf32>
    %33 = vector.broadcast %27 : vector<2x1x8xf32> to vector<2x3x8xf32>
    %34 = vector.broadcast %29 : vector<1x3x8xf32> to vector<2x3x8xf32>
    %35 = arith.mulf %33, %34 : vector<2x3x8xf32>
    %36 = arith.subf %32, %35 : vector<2x3x8xf32>
    %37 = vector.broadcast %26 : vector<2x1x8xf32> to vector<2x3x8xf32>
    %38 = vector.broadcast %29 : vector<1x3x8xf32> to vector<2x3x8xf32>
    %39 = arith.mulf %37, %38 : vector<2x3x8xf32>
    %40 = vector.broadcast %27 : vector<2x1x8xf32> to vector<2x3x8xf32>
    %41 = vector.broadcast %28 : vector<1x3x8xf32> to vector<2x3x8xf32>
    %42 = arith.mulf %40, %41 : vector<2x3x8xf32>
    %43 = arith.addf %39, %42 : vector<2x3x8xf32>
    %44 = arith.addf %18, %36 : vector<2x3x8xf32>
    %45 = arith.addf %25, %43 : vector<2x3x8xf32>
    %46 = vector.extract_strided_slice %1 {offsets = [0, 2, 0], sizes = [2, 1, 8], strides = [1, 1, 1]} : vector<2x3x8xf32> to vector<2x1x8xf32>
    %47 = vector.extract_strided_slice %3 {offsets = [0, 2, 0], sizes = [2, 1, 8], strides = [1, 1, 1]} : vector<2x3x8xf32> to vector<2x1x8xf32>
    %48 = vector.extract_strided_slice %5 {offsets = [2, 0, 0], sizes = [1, 3, 8], strides = [1, 1, 1]} : vector<3x3x8xf32> to vector<1x3x8xf32>
    %49 = vector.extract_strided_slice %7 {offsets = [2, 0, 0], sizes = [1, 3, 8], strides = [1, 1, 1]} : vector<3x3x8xf32> to vector<1x3x8xf32>
    %50 = vector.broadcast %46 : vector<2x1x8xf32> to vector<2x3x8xf32>
    %51 = vector.broadcast %48 : vector<1x3x8xf32> to vector<2x3x8xf32>
    %52 = arith.mulf %50, %51 : vector<2x3x8xf32>
    %53 = vector.broadcast %47 : vector<2x1x8xf32> to vector<2x3x8xf32>
    %54 = vector.broadcast %49 : vector<1x3x8xf32> to vector<2x3x8xf32>
    %55 = arith.mulf %53, %54 : vector<2x3x8xf32>
    %56 = arith.subf %52, %55 : vector<2x3x8xf32>
    %57 = vector.broadcast %46 : vector<2x1x8xf32> to vector<2x3x8xf32>
    %58 = vector.broadcast %49 : vector<1x3x8xf32> to vector<2x3x8xf32>
    %59 = arith.mulf %57, %58 : vector<2x3x8xf32>
    %60 = vector.broadcast %47 : vector<2x1x8xf32> to vector<2x3x8xf32>
    %61 = vector.broadcast %48 : vector<1x3x8xf32> to vector<2x3x8xf32>
    %62 = arith.mulf %60, %61 : vector<2x3x8xf32>
    %63 = arith.addf %59, %62 : vector<2x3x8xf32>
    %64 = arith.addf %44, %56 : vector<2x3x8xf32>
    %65 = arith.addf %45, %63 : vector<2x3x8xf32>
    %c0_15 = arith.constant 0 : index
    %c0_16 = arith.constant 0 : index
    %c0_17 = arith.constant 0 : index
    %c0_18 = arith.constant 0 : index
    %66 = vector.load %arg6[%c0_15, %c0_16, %c0_17, %c0_18] : memref<2x1x3x8xf32, #tpu.memory_space<vmem>>, vector<2x1x3x8xf32>
    %67 = vector.shape_cast %66 : vector<2x1x3x8xf32> to vector<2x3x8xf32>
    %68 = vector.shape_cast %64 : vector<2x3x8xf32> to vector<2x1x3x8xf32>
    tpu.vector_store %arg6[%c0_15, %c0_16, %c0_17, %c0_18], %68 {strides = array<i32>} : memref<2x1x3x8xf32, #tpu.memory_space<vmem>>, vector<2x1x3x8xf32>,
    %c0_19 = arith.constant 0 : index
    %c0_20 = arith.constant 0 : index
    %c0_21 = arith.constant 0 : index
    %c0_22 = arith.constant 0 : index
    %69 = vector.load %arg7[%c0_19, %c0_20, %c0_21, %c0_22] : memref<2x1x3x8xf32, #tpu.memory_space<vmem>>, vector<2x1x3x8xf32>
    %70 = vector.shape_cast %69 : vector<2x1x3x8xf32> to vector<2x3x8xf32>
    %71 = vector.shape_cast %65 : vector<2x3x8xf32> to vector<2x1x3x8xf32>
    tpu.vector_store %arg7[%c0_19, %c0_20, %c0_21, %c0_22], %71 {strides = array<i32>} : memref<2x1x3x8xf32, #tpu.memory_space<vmem>>, vector<2x1x3x8xf32>,
    return
  }
  func.func @transform_0(%arg0: i32, %arg1: i32) -> (i32, i32, i32, i32) {
    %c0_i32 = arith.constant 0 : i32
    %c0_i32_0 = arith.constant 0 : i32
    %c0_i32_1 = arith.constant 0 : i32
    return %arg1, %arg0, %c0_i32, %c0_i32_0 : i32, i32, i32, i32
  }
  func.func @transform_1(%arg0: i32, %arg1: i32) -> (i32, i32, i32, i32) {
    %c0_i32 = arith.constant 0 : i32
    %c0_i32_0 = arith.constant 0 : i32
    %c0_i32_1 = arith.constant 0 : i32
    return %arg1, %arg0, %c0_i32, %c0_i32_0 : i32, i32, i32, i32
  }
  func.func @transform_2(%arg0: i32, %arg1: i32) -> (i32, i32, i32, i32) {
    %c0_i32 = arith.constant 0 : i32
    %c0_i32_0 = arith.constant 0 : i32
    %c0_i32_1 = arith.constant 0 : i32
    %c0_i32_2 = arith.constant 0 : i32
    return %arg0, %c0_i32, %c0_i32_0, %c0_i32_1 : i32, i32, i32, i32
  }
  func.func @transform_3(%arg0: i32, %arg1: i32) -> (i32, i32, i32, i32) {
    %c0_i32 = arith.constant 0 : i32
    %c0_i32_0 = arith.constant 0 : i32
    %c0_i32_1 = arith.constant 0 : i32
    %c0_i32_2 = arith.constant 0 : i32
    return %arg0, %c0_i32, %c0_i32_0, %c0_i32_1 : i32, i32, i32, i32
  }
  func.func @transform_4(%arg0: i32, %arg1: i32) -> (i32, i32, i32, i32) {
    %c0_i32 = arith.constant 0 : i32
    %c0_i32_0 = arith.constant 0 : i32
    %c0_i32_1 = arith.constant 0 : i32
    return %arg1, %arg0, %c0_i32, %c0_i32_0 : i32, i32, i32, i32
  }
  func.func @transform_5(%arg0: i32, %arg1: i32) -> (i32, i32, i32, i32) {
    %c0_i32 = arith.constant 0 : i32
    %c0_i32_0 = arith.constant 0 : i32
    %c0_i32_1 = arith.constant 0 : i32
    return %arg1, %arg0, %c0_i32, %c0_i32_0 : i32, i32, i32, i32
  }
}

</mosaic_0001>

<llo_original>
// kernel: reverse.1
$region0: #{reverse.1}
  %s0 = inlined_call_operand.vmem [shape: f32[2,9,9], index: 0, kind: input, shape index: {}]
  %s1 = inlined_call_operand.vmem [shape: f32[2,9,9], index: 1, kind: output, shape index: {}]
  %v2 = vlaneseq
  %v3 = vsub.s32 8, %v2
  %4 = vset.pattern.permute.xlu0 %v3
  $region1: #{reverse.1} parent=0
    #allocation0 [shape = 'u8[16384]{0}', space=vmem, size = 0x4000, scoped, tag = 'operand span for operand 0']
    #allocation1 [shape = 'u8[16384]{0}', space=vmem, size = 0x4000, scoped, tag = 'operand span for operand 1']
    // Predicated region
    $region2: #{reverse.1} parent=1 // pred_check
      _
    $region3: #{reverse.1} parent=1 // pred_check_branch
      %6 = sbr.rel (0) target = $region5
    $region4: #{reverse.1} parent=1 // pred_region
      // Predicated region
      $region6: #{reverse.1} parent=4 // pred_check
        _
      $region7: #{reverse.1} parent=4 // pred_check_branch
        %8 = sbr.rel (0) target = $region9
      $region8: #{reverse.1} parent=4 // pred_region
        // Predicated region
        $region21: #{reverse.1} parent=8 // pred_check
          _
        $region22: #{reverse.1} parent=8 // pred_check_branch
          %30 = sbr.rel (0) target = $region24
        $region23: #{reverse.1} parent=8 // pred_region
          loop: start=0, step=1, limit=1
          $region25: #{reverse.1} parent=23 // loop_pre_header
            _
          $region26: #{reverse.1} parent=23 // loop_header
            %s32 = sphi 0, %s36
            %p33 = scmp.ge.s32.totalorder %s32, 1
            %s37 = sphi %s0, %s0
            %s38 = sphi [#allocation0], [#allocation0]
          $region27: #{reverse.1} parent=23 // loop_header_branch
            %35 = sbr.rel (%p33) target = $region31
          $region28: #{reverse.1} parent=23 // loop_body
            %v39 = vld [vmem:[%s37] sm:$0xff]
            %40 = vst [vmem:[%s38] sm:$0xff] %v39
            %v41 = vld [vmem:[%s37 + $0x8] sm:$0xff]
            %42 = vst [vmem:[%s38 + $0x8] sm:$0xff] %v41
            %v43 = vld [vmem:[%s37 + $0x10] sm:$0xff]
            %44 = vst [vmem:[%s38 + $0x10] sm:$0xff] %v43
            %v45 = vld [vmem:[%s37 + $0x18] sm:$0xff]
            %46 = vst [vmem:[%s38 + $0x18] sm:$0xff] %v45
          $region29: #{reverse.1} parent=23 // loop_footer
            %s36 = sadd.s32 1, %s32
          $region30: #{reverse.1} parent=23 // loop_footer_branch
            %31 = sbr.rel target = $region26
          $region31: #{reverse.1} parent=23 // loop_exit
            _
        $region24: #{reverse.1} parent=8 // pred_fallthru
          _
        // Predicated region
        $region32: #{reverse.1} parent=8 // pred_check
          _
        $region33: #{reverse.1} parent=8 // pred_check_branch
          %48 = sbr.rel target = $region35
        $region34: #{reverse.1} parent=8 // pred_region
          _
        $region35: #{reverse.1} parent=8 // pred_fallthru
          _
      $region9: #{reverse.1} parent=4 // pred_fallthru
        _
      // Predicated region
      $region10: #{reverse.1} parent=4 // pred_check
        _
      $region11: #{reverse.1} parent=4 // pred_check_branch
        %10 = sbr.rel target = $region13
      $region12: #{reverse.1} parent=4 // pred_region
        %s12 = ssub.s32 256, 1
        loop: start=0, step=1, limit=1
        $region14: #{reverse.1} parent=12 // loop_pre_header
          _
        $region15: #{reverse.1} parent=12 // loop_header
          %s14 = sphi 0, %s18
          %p15 = scmp.ge.s32.totalorder %s14, 1
          %s19 = sphi %s0, %s0
          %s20 = sphi [#allocation0], [#allocation0]
        $region16: #{reverse.1} parent=12 // loop_header_branch
          %17 = sbr.rel (%p15) target = $region20
        $region17: #{reverse.1} parent=12 // loop_body
          %v21 = vld [vmem:[%s19] sm:%s12]
          %22 = vst [vmem:[%s20] sm:%s12] %v21
          %v23 = vld [vmem:[%s19 + $0x8] sm:%s12]
          %24 = vst [vmem:[%s20 + $0x8] sm:%s12] %v23
          %v25 = vld [vmem:[%s19 + $0x10] sm:%s12]
          %26 = vst [vmem:[%s20 + $0x10] sm:%s12] %v25
          %v27 = vld [vmem:[%s19 + $0x18] sm:%s12]
          %28 = vst [vmem:[%s20 + $0x18] sm:%s12] %v27
        $region18: #{reverse.1} parent=12 // loop_footer
          %s18 = sadd.s32 1, %s14
        $region19: #{reverse.1} parent=12 // loop_footer_branch
          %13 = sbr.rel target = $region15
        $region20: #{reverse.1} parent=12 // loop_exit
          _
      $region13: #{reverse.1} parent=4 // pred_fallthru
        _
    $region5: #{reverse.1} parent=1 // pred_fallthru
      _
    %49 = vnop
    %v50 = vld [vmem:[#allocation0] sm:$0xff]
    %51 = vperm.xlu0 %4, %v50
    %v52 = vpop.permute.xlu0 %51
    %53 = vst [vmem:[#allocation1] sm:$0xff] %v52
    %s54 = scalar_lea.vmem [#allocation1], 8
    %s55 = scalar_lea.vmem [#allocation0], 8
    %v56 = vld [vmem:[%s55] sm:$0xff]
    %57 = vperm.xlu0 %4, %v56
    %v58 = vpop.permute.xlu0 %57
    %59 = vst [vmem:[%s54] sm:$0xff] %v58
    %s60 = scalar_lea.vmem [#allocation1], 16
    %s61 = scalar_lea.vmem [#allocation0], 16
    %v62 = vld [vmem:[%s61] sm:$0xff]
    %63 = vperm.xlu0 %4, %v62
    %v64 = vpop.permute.xlu0 %63
    %65 = vst [vmem:[%s60] sm:$0xff] %v64
    %s66 = scalar_lea.vmem %s60, 8 [#allocation1]
    %s67 = scalar_lea.vmem %s61, 8 [#allocation0]
    %v68 = vld [vmem:[%s67] sm:$0xff]
    %69 = vperm.xlu0 %4, %v68
    %v70 = vpop.permute.xlu0 %69
    %71 = vst [vmem:[%s66] sm:$0xff] %v70
    // Predicated region
    $region36: #{reverse.1} parent=1 // pred_check
      _
    $region37: #{reverse.1} parent=1 // pred_check_branch
      %73 = sbr.rel (0) target = $region39
    $region38: #{reverse.1} parent=1 // pred_region
      // Predicated region
      $region40: #{reverse.1} parent=38 // pred_check
        _
      $region41: #{reverse.1} parent=38 // pred_check_branch
        %75 = sbr.rel (0) target = $region43
      $region42: #{reverse.1} parent=38 // pred_region
        // Predicated region
        $region55: #{reverse.1} parent=42 // pred_check
          _
        $region56: #{reverse.1} parent=42 // pred_check_branch
          %97 = sbr.rel (0) target = $region58
        $region57: #{reverse.1} parent=42 // pred_region
          loop: start=0, step=1, limit=1
          $region59: #{reverse.1} parent=57 // loop_pre_header
            _
          $region60: #{reverse.1} parent=57 // loop_header
            %s99 = sphi 0, %s103
            %p100 = scmp.ge.s32.totalorder %s99, 1
            %s104 = sphi [#allocation1], [#allocation1]
            %s105 = sphi %s1, %s1
          $region61: #{reverse.1} parent=57 // loop_header_branch
            %102 = sbr.rel (%p100) target = $region65
          $region62: #{reverse.1} parent=57 // loop_body
            %v106 = vld [vmem:[%s104] sm:$0xff]
            %107 = vst [vmem:[%s105] sm:$0xff] %v106
            %v108 = vld [vmem:[%s104 + $0x8] sm:$0xff]
            %109 = vst [vmem:[%s105 + $0x8] sm:$0xff] %v108
            %v110 = vld [vmem:[%s104 + $0x10] sm:$0xff]
            %111 = vst [vmem:[%s105 + $0x10] sm:$0xff] %v110
            %v112 = vld [vmem:[%s104 + $0x18] sm:$0xff]
            %113 = vst [vmem:[%s105 + $0x18] sm:$0xff] %v112
          $region63: #{reverse.1} parent=57 // loop_footer
            %s103 = sadd.s32 1, %s99
          $region64: #{reverse.1} parent=57 // loop_footer_branch
            %98 = sbr.rel target = $region60
          $region65: #{reverse.1} parent=57 // loop_exit
            _
        $region58: #{reverse.1} parent=42 // pred_fallthru
          _
        // Predicated region
        $region66: #{reverse.1} parent=42 // pred_check
          _
        $region67: #{reverse.1} parent=42 // pred_check_branch
          %115 = sbr.rel target = $region69
        $region68: #{reverse.1} parent=42 // pred_region
          _
        $region69: #{reverse.1} parent=42 // pred_fallthru
          _
      $region43: #{reverse.1} parent=38 // pred_fallthru
        _
      // Predicated region
      $region44: #{reverse.1} parent=38 // pred_check
        _
      $region45: #{reverse.1} parent=38 // pred_check_branch
        %77 = sbr.rel target = $region47
      $region46: #{reverse.1} parent=38 // pred_region
        %s79 = ssub.s32 256, 1
        loop: start=0, step=1, limit=1
        $region48: #{reverse.1} parent=46 // loop_pre_header
          _
        $region49: #{reverse.1} parent=46 // loop_header
          %s81 = sphi 0, %s85
          %p82 = scmp.ge.s32.totalorder %s81, 1
          %s86 = sphi [#allocation1], [#allocation1]
          %s87 = sphi %s1, %s1
        $region50: #{reverse.1} parent=46 // loop_header_branch
          %84 = sbr.rel (%p82) target = $region54
        $region51: #{reverse.1} parent=46 // loop_body
          %v88 = vld [vmem:[%s86] sm:%s79]
          %89 = vst [vmem:[%s87] sm:%s79] %v88
          %v90 = vld [vmem:[%s86 + $0x8] sm:%s79]
          %91 = vst [vmem:[%s87 + $0x8] sm:%s79] %v90
          %v92 = vld [vmem:[%s86 + $0x10] sm:%s79]
          %93 = vst [vmem:[%s87 + $0x10] sm:%s79] %v92
          %v94 = vld [vmem:[%s86 + $0x18] sm:%s79]
          %95 = vst [vmem:[%s87 + $0x18] sm:%s79] %v94
        $region52: #{reverse.1} parent=46 // loop_footer
          %s85 = sadd.s32 1, %s81
        $region53: #{reverse.1} parent=46 // loop_footer_branch
          %80 = sbr.rel target = $region49
        $region54: #{reverse.1} parent=46 // loop_exit
          _
      $region47: #{reverse.1} parent=38 // pred_fallthru
        _
    $region39: #{reverse.1} parent=1 // pred_fallthru
      _
    %116 = vnop

// kernel: group_spectral_conv1d.1
$region0: #{group_spectral_conv1d.1}
  #allocation0 [shape = 'u32[]', space=smem, size = 0x4, offset = 0x4, fixed_abs, tag = 'smem constant byte address 0x4 - core index']
  #allocation1 [shape = 'u32[144,128]{1,0:T(1,128)}', space=vmem, size = 0x12000, scoped, tag = 'internal scratch']
  %s0 = inlined_call_operand.vmem [shape: f32[2,3,3,8], index: 0, kind: input, shape index: {}]
  %s1 = inlined_call_operand.vmem [shape: f32[2,3,3,8], index: 1, kind: input, shape index: {}]
  %s2 = inlined_call_operand.vmem [shape: f32[3,3,3,8], index: 2, kind: input, shape index: {}]
  %s3 = inlined_call_operand.vmem [shape: f32[3,3,3,8], index: 3, kind: input, shape index: {}]
  %s4 = inlined_call_operand.vmem [shape: f32[2,3,3,8], index: 4, kind: output, shape index: {0}]
  %s5 = inlined_call_operand.vmem [shape: f32[2,3,3,8], index: 5, kind: output, shape index: {1}]
  %6 = xla_tuple %s4, %s5
  %s7 = sld [smem:[#allocation0]]
  $region213: #{group_spectral_conv1d.1} parent=0
    _
  %s9 = ssub.s32 1, %s7
  %s10 = scalar_select 0, %s9, %s7
  $region1: #{group_spectral_conv1d.1} parent=0
    #allocation2 [shape = 'u8[8192]{0}', space=vmem, size = 0x2000, scoped, tag = 'input window, operand 0']
    #allocation3 [shape = 'u8[8192]{0}', space=vmem, size = 0x2000, scoped, tag = 'input window, operand 1']
    #allocation4 [shape = 'u8[8192]{0}', space=vmem, size = 0x2000, scoped, tag = 'output window, operand 0']
    #allocation5 [shape = 'u8[8192]{0}', space=vmem, size = 0x2000, scoped, tag = 'output window, operand 1']
    loop: start=0, step=1, limit=5
    $region2: #{group_spectral_conv1d.1} parent=1 // loop_pre_header
      _
    $region3: #{group_spectral_conv1d.1} parent=1 // loop_header
      %s12 = sphi 0, %s16
      %p13 = scmp.ge.s32.totalorder %s12, 5
      %s19 = sphi 0, %s31
      %s20 = sphi 0, %s27
      %s21 = sphi 0, %s19
      %s22 = sphi 0, %s20
      %s23 = sphi 0, %s21
      %s24 = sphi 0, %s22
      %s36 = sphi 0, %s38
      %s39 = sphi 0, %s36
      %s40 = sphi 0, %s39
      %s56 = sphi 0, %s40
      %s64 = sphi 0, %s66
      %s67 = sphi 0, %s64
      %s68 = sphi 0, %s67
      %s84 = sphi 0, %s68
      %s90 = sphi 0, %s92
      %s93 = sphi 0, %s90
      %s94 = sphi 0, %s93
      %s110 = sphi 0, %s94
      %s116 = sphi 0, %s118
      %s119 = sphi 0, %s116
      %s120 = sphi 0, %s119
      %s136 = sphi 0, %s120
      %s144 = sphi 0, %s146
      %s147 = sphi 0, %s144
      %s148 = sphi 0, %s147
      %s164 = sphi 0, %s148
      %s172 = sphi 0, %s174
      %s175 = sphi 0, %s172
      %s176 = sphi 0, %s175
      %s192 = sphi 0, %s176
    $region4: #{group_spectral_conv1d.1} parent=1 // loop_header_branch
      %15 = sbr.rel (%p13) target = $region8
    $region5: #{group_spectral_conv1d.1} parent=1 // loop_body
      %s17 = ssub.s32 %s12, 1
      %s18 = ssub.s32 %s12, 2
      %s25 = sadd.s32 1, %s20
      %p26 = scmp.ge.s32.totalorder %s25, 1
      %s27 = scalar_select %p26, 0, %s25
      %s28 = sadd.s32 1, %s19
      %s29 = scalar_select %p26, %s28, %s19
      %p30 = scmp.ge.s32.totalorder %s29, 3
      %s31 = scalar_select %p30, 0, %s29
      %s32 = ssub.s32 %s20, %s27
      %s33 = ssub.s32 %s19, %s31
      %s34 = sor.u32 %s32, %s33
      %p35 = scmp.eq.s32.totalorder %s34, 0
      %s37 = sadd.s32 %s36, 1
      %s38 = scalar_select %p35, %s36, %s37
      %p41 = pneg %p35
      %p42 = scmp.eq.s32.totalorder %s12, 2
      %p43 = por %p41, %p42
      %p44 = scmp.ne.s32.totalorder %s36, %s39
      %p45 = scmp.eq.s32.totalorder %s12, 0
      %p46 = por %p44, %p45
      %p47 = scmp.ne.s32.totalorder %s36, %s39
      %p48 = scmp.eq.s32.totalorder %s17, 2
      %p49 = por %p47, %p48
      %p50 = scmp.ne.s32.totalorder %s39, %s40
      %p51 = scmp.eq.s32.totalorder %s17, 0
      %p52 = por %p50, %p51
      %p53 = scmp.ne.s32.totalorder %s39, %s40
      %p54 = scmp.eq.s32.totalorder %s18, 2
      %p55 = por %p53, %p54
      %p57 = scmp.ne.s32.totalorder %s40, %s56
      %p58 = scmp.eq.s32.totalorder %s18, 0
      %p59 = por %p57, %p58
      %s60 = ssub.s32 %s20, %s27
      %s61 = ssub.s32 %s19, %s31
      %s62 = sor.u32 %s60, %s61
      %p63 = scmp.eq.s32.totalorder %s62, 0
      %s65 = sadd.s32 %s64, 1
      %s66 = scalar_select %p63, %s64, %s65
      %p69 = pneg %p63
      %p70 = scmp.eq.s32.totalorder %s12, 2
      %p71 = por %p69, %p70
      %p72 = scmp.ne.s32.totalorder %s64, %s67
      %p73 = scmp.eq.s32.totalorder %s12, 0
      %p74 = por %p72, %p73
      %p75 = scmp.ne.s32.totalorder %s64, %s67
      %p76 = scmp.eq.s32.totalorder %s17, 2
      %p77 = por %p75, %p76
      %p78 = scmp.ne.s32.totalorder %s67, %s68
      %p79 = scmp.eq.s32.totalorder %s17, 0
      %p80 = por %p78, %p79
      %p81 = scmp.ne.s32.totalorder %s67, %s68
      %p82 = scmp.eq.s32.totalorder %s18, 2
      %p83 = por %p81, %p82
      %p85 = scmp.ne.s32.totalorder %s68, %s84
      %p86 = scmp.eq.s32.totalorder %s18, 0
      %p87 = por %p85, %p86
      %s88 = ssub.s32 %s19, %s31
      %p89 = scmp.eq.s32.totalorder %s88, 0
      %s91 = sadd.s32 %s90, 1
      %s92 = scalar_select %p89, %s90, %s91
      %p95 = pneg %p89
      %p96 = scmp.eq.s32.totalorder %s12, 2
      %p97 = por %p95, %p96
      %p98 = scmp.ne.s32.totalorder %s90, %s93
      %p99 = scmp.eq.s32.totalorder %s12, 0
      %p100 = por %p98, %p99
      %p101 = scmp.ne.s32.totalorder %s90, %s93
      %p102 = scmp.eq.s32.totalorder %s17, 2
      %p103 = por %p101, %p102
      %p104 = scmp.ne.s32.totalorder %s93, %s94
      %p105 = scmp.eq.s32.totalorder %s17, 0
      %p106 = por %p104, %p105
      %p107 = scmp.ne.s32.totalorder %s93, %s94
      %p108 = scmp.eq.s32.totalorder %s18, 2
      %p109 = por %p107, %p108
      %p111 = scmp.ne.s32.totalorder %s94, %s110
      %p112 = scmp.eq.s32.totalorder %s18, 0
      %p113 = por %p111, %p112
      %s114 = ssub.s32 %s19, %s31
      %p115 = scmp.eq.s32.totalorder %s114, 0
      %s117 = sadd.s32 %s116, 1
      %s118 = scalar_select %p115, %s116, %s117
      %p121 = pneg %p115
      %p122 = scmp.eq.s32.totalorder %s12, 2
      %p123 = por %p121, %p122
      %p124 = scmp.ne.s32.totalorder %s116, %s119
      %p125 = scmp.eq.s32.totalorder %s12, 0
      %p126 = por %p124, %p125
      %p127 = scmp.ne.s32.totalorder %s116, %s119
      %p128 = scmp.eq.s32.totalorder %s17, 2
      %p129 = por %p127, %p128
      %p130 = scmp.ne.s32.totalorder %s119, %s120
      %p131 = scmp.eq.s32.totalorder %s17, 0
      %p132 = por %p130, %p131
      %p133 = scmp.ne.s32.totalorder %s119, %s120
      %p134 = scmp.eq.s32.totalorder %s18, 2
      %p135 = por %p133, %p134
      %p137 = scmp.ne.s32.totalorder %s120, %s136
      %p138 = scmp.eq.s32.totalorder %s18, 0
      %p139 = por %p137, %p138
      %s140 = ssub.s32 %s20, %s27
      %s141 = ssub.s32 %s19, %s31
      %s142 = sor.u32 %s140, %s141
      %p143 = scmp.eq.s32.totalorder %s142, 0
      %s145 = sadd.s32 %s144, 1
      %s146 = scalar_select %p143, %s144, %s145
      %p149 = pneg %p143
      %p150 = scmp.eq.s32.totalorder %s12, 2
      %p151 = por %p149, %p150
      %p152 = scmp.ne.s32.totalorder %s144, %s147
      %p153 = scmp.eq.s32.totalorder %s12, 0
      %p154 = por %p152, %p153
      %p155 = scmp.ne.s32.totalorder %s144, %s147
      %p156 = scmp.eq.s32.totalorder %s17, 2
      %p157 = por %p155, %p156
      %p158 = scmp.ne.s32.totalorder %s147, %s148
      %p159 = scmp.eq.s32.totalorder %s17, 0
      %p160 = por %p158, %p159
      %p161 = scmp.ne.s32.totalorder %s147, %s148
      %p162 = scmp.eq.s32.totalorder %s18, 2
      %p163 = por %p161, %p162
      %p165 = scmp.ne.s32.totalorder %s148, %s164
      %p166 = scmp.eq.s32.totalorder %s18, 0
      %p167 = por %p165, %p166
      %s168 = ssub.s32 %s20, %s27
      %s169 = ssub.s32 %s19, %s31
      %s170 = sor.u32 %s168, %s169
      %p171 = scmp.eq.s32.totalorder %s170, 0
      %s173 = sadd.s32 %s172, 1
      %s174 = scalar_select %p171, %s172, %s173
      %p177 = pneg %p171
      %p178 = scmp.eq.s32.totalorder %s12, 2
      %p179 = por %p177, %p178
      %p180 = scmp.ne.s32.totalorder %s172, %s175
      %p181 = scmp.eq.s32.totalorder %s12, 0
      %p182 = por %p180, %p181
      %p183 = scmp.ne.s32.totalorder %s172, %s175
      %p184 = scmp.eq.s32.totalorder %s17, 2
      %p185 = por %p183, %p184
      %p186 = scmp.ne.s32.totalorder %s175, %s176
      %p187 = scmp.eq.s32.totalorder %s17, 0
      %p188 = por %p186, %p187
      %p189 = scmp.ne.s32.totalorder %s175, %s176
      %p190 = scmp.eq.s32.totalorder %s18, 2
      %p191 = por %p189, %p190
      %p193 = scmp.ne.s32.totalorder %s176, %s192
      %p194 = scmp.eq.s32.totalorder %s18, 0
      %p195 = por %p193, %p194
      %p196 = scmp.le.s32.totalorder 1, %s12
      %p197 = scmp.lt.s32.totalorder %s12, 4
      %p198 = pnand %p196, %p197
      %p199 = pneg %p198
      // Predicated region
      $region9: #{group_spectral_conv1d.1} parent=5 // pred_check
        _
      $region10: #{group_spectral_conv1d.1} parent=5 // pred_check_branch
        %201 = sbr.rel (%p198) target = $region12
      $region11: #{group_spectral_conv1d.1} parent=5 // pred_region
        %s202 = ssub.s32 %s12, 1
      $region12: #{group_spectral_conv1d.1} parent=5 // pred_fallthru
        _
      %p203 = scmp.lt.s32.totalorder %s12, 3
      // Predicated region
      $region13: #{group_spectral_conv1d.1} parent=5 // pred_check
        %p204 = pneg %p203
      $region14: #{group_spectral_conv1d.1} parent=5 // pred_check_branch
        %206 = sbr.rel (%p204) target = $region16
      $region15: #{group_spectral_conv1d.1} parent=5 // pred_region
        // Predicated region
        $region17: #{group_spectral_conv1d.1} parent=15 // pred_check
          %p207 = pneg %p46
        $region18: #{group_spectral_conv1d.1} parent=15 // pred_check_branch
          %209 = sbr.rel (%p207) target = $region20
        $region19: #{group_spectral_conv1d.1} parent=15 // pred_region
          %s210 = sand.u32 %s36, 1
          %s211 = sand.u32 %s36, 1
          %s212 = smul.addr %s211, 8
          %s213 = scalar_lea.vmem [#allocation2], %s212
          %s214 = smul.u32 2, %s20
          %s215 = smul.addr %s214, 3
          %s216 = sadd.s32 %s19, %s215
          %s217 = smul.addr %s216, 4
          %s218 = scalar_lea.vmem %s0, %s217
          // Predicated region
          $region21: #{group_spectral_conv1d.1} parent=19 // pred_check
            _
          $region22: #{group_spectral_conv1d.1} parent=19 // pred_check_branch
            %220 = sbr.rel (0) target = $region24
          $region23: #{group_spectral_conv1d.1} parent=19 // pred_region
            // Predicated region
            $region25: #{group_spectral_conv1d.1} parent=23 // pred_check
              _
            $region26: #{group_spectral_conv1d.1} parent=23 // pred_check_branch
              %222 = sbr.rel target = $region28
            $region27: #{group_spectral_conv1d.1} parent=23 // pred_region
              // Predicated region
              $region40: #{group_spectral_conv1d.1} parent=27 // pred_check
                _
              $region41: #{group_spectral_conv1d.1} parent=27 // pred_check_branch
                %240 = sbr.rel (0) target = $region43
              $region42: #{group_spectral_conv1d.1} parent=27 // pred_region
                loop: start=0, step=1, limit=1
                $region44: #{group_spectral_conv1d.1} parent=42 // loop_pre_header
                  _
                $region45: #{group_spectral_conv1d.1} parent=42 // loop_header
                  %s242 = sphi 0, %s246
                  %p243 = scmp.ge.s32.totalorder %s242, 1
                  %s247 = sphi %s218, %s218
                  %s248 = sphi %s213, %s213
                $region46: #{group_spectral_conv1d.1} parent=42 // loop_header_branch
                  %245 = sbr.rel (%p243) target = $region50
                $region47: #{group_spectral_conv1d.1} parent=42 // loop_body
                  _
                $region48: #{group_spectral_conv1d.1} parent=42 // loop_footer
                  %s246 = sadd.s32 1, %s242
                $region49: #{group_spectral_conv1d.1} parent=42 // loop_footer_branch
                  %241 = sbr.rel target = $region45
                $region50: #{group_spectral_conv1d.1} parent=42 // loop_exit
                  _
                %s250 = ssub.s32 16, 1
                loop: start=0, step=1, limit=1
                $region51: #{group_spectral_conv1d.1} parent=42 // loop_pre_header
                  _
                $region52: #{group_spectral_conv1d.1} parent=42 // loop_header
                  %s252 = sphi 0, %s256
                  %p253 = scmp.ge.s32.totalorder %s252, 1
                  %s257 = sphi %s218, %s218
                  %s258 = sphi %s213, %s213
                $region53: #{group_spectral_conv1d.1} parent=42 // loop_header_branch
                  %255 = sbr.rel (%p253) target = $region57
                $region54: #{group_spectral_conv1d.1} parent=42 // loop_body
                  %v259 = vld [vmem:[%s257] sm:%s250]
                  %260 = vst [vmem:[%s258] sm:%s250] %v259
                  %v261 = vld [vmem:[%s257 + $0xc] sm:%s250]
                  %262 = vst [vmem:[%s258 + $0x4] sm:%s250] %v261
                $region55: #{group_spectral_conv1d.1} parent=42 // loop_footer
                  %s256 = sadd.s32 1, %s252
                $region56: #{group_spectral_conv1d.1} parent=42 // loop_footer_branch
                  %251 = sbr.rel target = $region52
                $region57: #{group_spectral_conv1d.1} parent=42 // loop_exit
                  _
              $region43: #{group_spectral_conv1d.1} parent=27 // pred_fallthru
                _
            $region28: #{group_spectral_conv1d.1} parent=23 // pred_fallthru
              _
            // Predicated region
            $region29: #{group_spectral_conv1d.1} parent=23 // pred_check
              _
            $region30: #{group_spectral_conv1d.1} parent=23 // pred_check_branch
              %224 = sbr.rel (0) target = $region32
            $region31: #{group_spectral_conv1d.1} parent=23 // pred_region
              %s226 = ssub.s32 16, 1
              loop: start=0, step=1, limit=1
              $region33: #{group_spectral_conv1d.1} parent=31 // loop_pre_header
                _
              $region34: #{group_spectral_conv1d.1} parent=31 // loop_header
                %s228 = sphi 0, %s232
                %p229 = scmp.ge.s32.totalorder %s228, 1
                %s233 = sphi %s218, %s218
                %s234 = sphi %s213, %s213
              $region35: #{group_spectral_conv1d.1} parent=31 // loop_header_branch
                %231 = sbr.rel (%p229) target = $region39
              $region36: #{group_spectral_conv1d.1} parent=31 // loop_body
                %v235 = vld [vmem:[%s233] sm:%s226]
                %236 = vst [vmem:[%s234] sm:%s226] %v235
                %v237 = vld [vmem:[%s233 + $0xc] sm:%s226]
                %238 = vst [vmem:[%s234 + $0x4] sm:%s226] %v237
              $region37: #{group_spectral_conv1d.1} parent=31 // loop_footer
                %s232 = sadd.s32 1, %s228
              $region38: #{group_spectral_conv1d.1} parent=31 // loop_footer_branch
                %227 = sbr.rel target = $region34
              $region39: #{group_spectral_conv1d.1} parent=31 // loop_exit
                _
            $region32: #{group_spectral_conv1d.1} parent=23 // pred_fallthru
              _
          $region24: #{group_spectral_conv1d.1} parent=19 // pred_fallthru
            _
          %263 = vnop
        $region20: #{group_spectral_conv1d.1} parent=15 // pred_fallthru
          _
        // Predicated region
        $region58: #{group_spectral_conv1d.1} parent=15 // pred_check
          %p264 = pneg %p74
        $region59: #{group_spectral_conv1d.1} parent=15 // pred_check_branch
          %266 = sbr.rel (%p264) target = $region61
        $region60: #{group_spectral_conv1d.1} parent=15 // pred_region
          %s267 = sand.u32 %s64, 1
          %s268 = sand.u32 %s64, 1
          %s269 = smul.addr %s268, 8
          %s270 = scalar_lea.vmem [#allocation3], %s269
          %s271 = smul.u32 2, %s20
          %s272 = smul.addr %s271, 3
          %s273 = sadd.s32 %s19, %s272
          %s274 = smul.addr %s273, 4
          %s275 = scalar_lea.vmem %s1, %s274
          // Predicated region
          $region62: #{group_spectral_conv1d.1} parent=60 // pred_check
            _
          $region63: #{group_spectral_conv1d.1} parent=60 // pred_check_branch
            %277 = sbr.rel (0) target = $region65
          $region64: #{group_spectral_conv1d.1} parent=60 // pred_region
            // Predicated region
            $region66: #{group_spectral_conv1d.1} parent=64 // pred_check
              _
            $region67: #{group_spectral_conv1d.1} parent=64 // pred_check_branch
              %279 = sbr.rel target = $region69
            $region68: #{group_spectral_conv1d.1} parent=64 // pred_region
              // Predicated region
              $region81: #{group_spectral_conv1d.1} parent=68 // pred_check
                _
              $region82: #{group_spectral_conv1d.1} parent=68 // pred_check_branch
                %297 = sbr.rel (0) target = $region84
              $region83: #{group_spectral_conv1d.1} parent=68 // pred_region
                loop: start=0, step=1, limit=1
                $region85: #{group_spectral_conv1d.1} parent=83 // loop_pre_header
                  _
                $region86: #{group_spectral_conv1d.1} parent=83 // loop_header
                  %s299 = sphi 0, %s303
                  %p300 = scmp.ge.s32.totalorder %s299, 1
                  %s304 = sphi %s275, %s275
                  %s305 = sphi %s270, %s270
                $region87: #{group_spectral_conv1d.1} parent=83 // loop_header_branch
                  %302 = sbr.rel (%p300) target = $region91
                $region88: #{group_spectral_conv1d.1} parent=83 // loop_body
                  _
                $region89: #{group_spectral_conv1d.1} parent=83 // loop_footer
                  %s303 = sadd.s32 1, %s299
                $region90: #{group_spectral_conv1d.1} parent=83 // loop_footer_branch
                  %298 = sbr.rel target = $region86
                $region91: #{group_spectral_conv1d.1} parent=83 // loop_exit
                  _
                %s307 = ssub.s32 16, 1
                loop: start=0, step=1, limit=1
                $region92: #{group_spectral_conv1d.1} parent=83 // loop_pre_header
                  _
                $region93: #{group_spectral_conv1d.1} parent=83 // loop_header
                  %s309 = sphi 0, %s313
                  %p310 = scmp.ge.s32.totalorder %s309, 1
                  %s314 = sphi %s275, %s275
                  %s315 = sphi %s270, %s270
                $region94: #{group_spectral_conv1d.1} parent=83 // loop_header_branch
                  %312 = sbr.rel (%p310) target = $region98
                $region95: #{group_spectral_conv1d.1} parent=83 // loop_body
                  %v316 = vld [vmem:[%s314] sm:%s307]
                  %317 = vst [vmem:[%s315] sm:%s307] %v316
                  %v318 = vld [vmem:[%s314 + $0xc] sm:%s307]
                  %319 = vst [vmem:[%s315 + $0x4] sm:%s307] %v318
                $region96: #{group_spectral_conv1d.1} parent=83 // loop_footer
                  %s313 = sadd.s32 1, %s309
                $region97: #{group_spectral_conv1d.1} parent=83 // loop_footer_branch
                  %308 = sbr.rel target = $region93
                $region98: #{group_spectral_conv1d.1} parent=83 // loop_exit
                  _
              $region84: #{group_spectral_conv1d.1} parent=68 // pred_fallthru
                _
            $region69: #{group_spectral_conv1d.1} parent=64 // pred_fallthru
              _
            // Predicated region
            $region70: #{group_spectral_conv1d.1} parent=64 // pred_check
              _
            $region71: #{group_spectral_conv1d.1} parent=64 // pred_check_branch
              %281 = sbr.rel (0) target = $region73
            $region72: #{group_spectral_conv1d.1} parent=64 // pred_region
              %s283 = ssub.s32 16, 1
              loop: start=0, step=1, limit=1
              $region74: #{group_spectral_conv1d.1} parent=72 // loop_pre_header
                _
              $region75: #{group_spectral_conv1d.1} parent=72 // loop_header
                %s285 = sphi 0, %s289
                %p286 = scmp.ge.s32.totalorder %s285, 1
                %s290 = sphi %s275, %s275
                %s291 = sphi %s270, %s270
              $region76: #{group_spectral_conv1d.1} parent=72 // loop_header_branch
                %288 = sbr.rel (%p286) target = $region80
              $region77: #{group_spectral_conv1d.1} parent=72 // loop_body
                %v292 = vld [vmem:[%s290] sm:%s283]
                %293 = vst [vmem:[%s291] sm:%s283] %v292
                %v294 = vld [vmem:[%s290 + $0xc] sm:%s283]
                %295 = vst [vmem:[%s291 + $0x4] sm:%s283] %v294
              $region78: #{group_spectral_conv1d.1} parent=72 // loop_footer
                %s289 = sadd.s32 1, %s285
              $region79: #{group_spectral_conv1d.1} parent=72 // loop_footer_branch
                %284 = sbr.rel target = $region75
              $region80: #{group_spectral_conv1d.1} parent=72 // loop_exit
                _
            $region73: #{group_spectral_conv1d.1} parent=64 // pred_fallthru
              _
          $region65: #{group_spectral_conv1d.1} parent=60 // pred_fallthru
            _
          %320 = vnop
        $region61: #{group_spectral_conv1d.1} parent=15 // pred_fallthru
          _
        // Predicated region
        $region99: #{group_spectral_conv1d.1} parent=15 // pred_check
          %p321 = pneg %p100
        $region100: #{group_spectral_conv1d.1} parent=15 // pred_check_branch
          %323 = sbr.rel (%p321) target = $region102
        $region101: #{group_spectral_conv1d.1} parent=15 // pred_region
          %p324 = scmp.lt.s32.totalorder %s19, 2
          %s325 = scalar_select %p324, %s19, 2
          %s326 = smul.addr %s325, 3
          %s327 = smul.addr %s326, 4
          %s328 = scalar_lea.vmem %s2, %s327
        $region102: #{group_spectral_conv1d.1} parent=15 // pred_fallthru
          _
        // Predicated region
        $region103: #{group_spectral_conv1d.1} parent=15 // pred_check
          %p329 = pneg %p126
        $region104: #{group_spectral_conv1d.1} parent=15 // pred_check_branch
          %331 = sbr.rel (%p329) target = $region106
        $region105: #{group_spectral_conv1d.1} parent=15 // pred_region
          %p332 = scmp.lt.s32.totalorder %s19, 2
          %s333 = scalar_select %p332, %s19, 2
          %s334 = smul.addr %s333, 3
          %s335 = smul.addr %s334, 4
          %s336 = scalar_lea.vmem %s3, %s335
        $region106: #{group_spectral_conv1d.1} parent=15 // pred_fallthru
          _
      $region16: #{group_spectral_conv1d.1} parent=5 // pred_fallthru
        _
      %p337 = scmp.le.s32.totalorder 1, %s12
      %p338 = scmp.lt.s32.totalorder %s12, 4
      %p339 = pnand %p337, %p338
      %p340 = pneg %p339
      // Predicated region
      $region107: #{group_spectral_conv1d.1} parent=5 // pred_check
        _
      $region108: #{group_spectral_conv1d.1} parent=5 // pred_check_branch
        %342 = sbr.rel (%p339) target = $region110
      $region109: #{group_spectral_conv1d.1} parent=5 // pred_region
        %s343 = ssub.s32 %s12, 1
        %s344 = sand.u32 %s39, 1
        %s345 = sand.u32 %s39, 1
        %s346 = smul.addr %s345, 8
        %s347 = scalar_lea.vmem [#allocation2], %s346
        // Predicated region
        $region111: #{group_spectral_conv1d.1} parent=109 // pred_check
          %p348 = pneg %p52
        $region112: #{group_spectral_conv1d.1} parent=109 // pred_check_branch
          %350 = sbr.rel (%p348) target = $region114
        $region113: #{group_spectral_conv1d.1} parent=109 // pred_region
          _
        $region114: #{group_spectral_conv1d.1} parent=109 // pred_fallthru
          _
        %s351 = sand.u32 %s67, 1
        %s352 = sand.u32 %s67, 1
        %s353 = smul.addr %s352, 8
        %s354 = scalar_lea.vmem [#allocation3], %s353
        // Predicated region
        $region115: #{group_spectral_conv1d.1} parent=109 // pred_check
          %p355 = pneg %p80
        $region116: #{group_spectral_conv1d.1} parent=109 // pred_check_branch
          %357 = sbr.rel (%p355) target = $region118
        $region117: #{group_spectral_conv1d.1} parent=109 // pred_region
          _
        $region118: #{group_spectral_conv1d.1} parent=109 // pred_fallthru
          _
        %s358 = sand.u32 %s39, 1
        %s359 = sand.u32 %s39, 1
        %s360 = smul.addr %s359, 8
        %s361 = scalar_lea.vmem [#allocation2], %s360
        %p362 = pneg %p52
        %p363 = pneg %p49
        %s364 = sand.u32 %s67, 1
        %s365 = sand.u32 %s67, 1
        %s366 = smul.addr %s365, 8
        %s367 = scalar_lea.vmem [#allocation3], %s366
        %p368 = pneg %p80
        %p369 = pneg %p77
        %p370 = scmp.lt.s32.totalorder %s21, 2
        %s371 = scalar_select %p370, %s21, 2
        %s372 = smul.addr %s371, 3
        %s373 = smul.addr %s372, 4
        %s374 = scalar_lea.vmem %s2, %s373
        %p375 = pneg %p106
        %p376 = pneg %p103
        %p377 = scmp.lt.s32.totalorder %s21, 2
        %s378 = scalar_select %p377, %s21, 2
        %s379 = smul.addr %s378, 3
        %s380 = smul.addr %s379, 4
        %s381 = scalar_lea.vmem %s3, %s380
        %p382 = pneg %p132
        %p383 = pneg %p129
        %p384 = pneg %p160
        %p385 = pneg %p157
        %s386 = sand.u32 %s147, 1
        %s387 = sand.u32 %s147, 1
        %s388 = smul.addr %s387, 8
        %s389 = scalar_lea.vmem [#allocation4], %s388
        %p390 = pneg %p188
        %p391 = pneg %p185
        %s392 = sand.u32 %s175, 1
        %s393 = sand.u32 %s175, 1
        %s394 = smul.addr %s393, 8
        %s395 = scalar_lea.vmem [#allocation5], %s394
        %s396 = smul.u32 2, %s22
        %s397 = smul.u32 2, %s22
        %p398 = scmp.lt.s32.totalorder %s21, 2
        %s399 = scalar_select %p398, %s21, 2
        %s400 = smul.addr %s399, 3
        %s401 = smul.addr %s400, 4
        %s402 = scalar_lea.vmem %s2, %s401
        %p403 = scmp.lt.s32.totalorder %s21, 2
        %s404 = scalar_select %p403, %s21, 2
        %s405 = smul.addr %s404, 3
        %s406 = smul.addr %s405, 4
        %s407 = scalar_lea.vmem %s3, %s406
        %s408 = smul.u32 2, %s22
        %s409 = smul.u32 2, %s22
        %v410 = vld [vmem:[%s347] sm:$0x7]
        %v411 = vld [vmem:[%s347 + $0x4] sm:$0x7]
        %v412 = vld [vmem:[%s354] sm:$0x7]
        %v413 = vld [vmem:[%s354 + $0x4] sm:$0x7]
        %v414 = vld [vmem:[%s402] sm:$0x7]
        %v415 = vld [vmem:[%s402 + $0x4] sm:$0x7]
        %v416 = vld [vmem:[%s402 + $0x8] sm:$0x7]
        %v417 = vld [vmem:[%s407] sm:$0x7]
        %v418 = vld [vmem:[%s407 + $0x4] sm:$0x7]
        %v419 = vld [vmem:[%s407 + $0x8] sm:$0x7]
        %v420 = vlaneseq
        %v421 = vshrl.u32 %v420, 7
        %v422 = vsub.s32 0, %v421
        %v423 = vrot.slane %v410, %v422
        %v424 = vlaneseq
        %v425 = vshrl.u32 %v424, 7
        %v426 = vsub.s32 0, %v425
        %v427 = vrot.slane %v411, %v426
        %v428 = vmul.f32 %v423, %v414
        %v429 = vmul.f32 %v427, %v414
        %v430 = vlaneseq
        %v431 = vshrl.u32 %v430, 7
        %v432 = vsub.s32 0, %v431
        %v433 = vrot.slane %v412, %v432
        %v434 = vlaneseq
        %v435 = vshrl.u32 %v434, 7
        %v436 = vsub.s32 0, %v435
        %v437 = vrot.slane %v413, %v436
        %v438 = vmul.f32 %v433, %v417
        %v439 = vmul.f32 %v437, %v417
        %v440 = vsub.f32 %v428, %v438
        %v441 = vsub.f32 %v429, %v439
        %v442 = vmul.f32 %v423, %v417
        %v443 = vmul.f32 %v427, %v417
        %v444 = vmul.f32 %v433, %v414
        %v445 = vmul.f32 %v437, %v414
        %v446 = vadd.f32 %v442, %v444
        %v447 = vadd.f32 %v443, %v445
        %v448 = vlaneseq
        %v449 = vshrl.u32 %v448, 7
        %v450 = vsub.s32 1, %v449
        %v451 = vrot.slane %v410, %v450
        %v452 = vlaneseq
        %v453 = vshrl.u32 %v452, 7
        %v454 = vsub.s32 1, %v453
        %v455 = vrot.slane %v411, %v454
        %v456 = vmul.f32 %v451, %v415
        %v457 = vmul.f32 %v455, %v415
        %v458 = vlaneseq
        %v459 = vshrl.u32 %v458, 7
        %v460 = vsub.s32 1, %v459
        %v461 = vrot.slane %v412, %v460
        %v462 = vlaneseq
        %v463 = vshrl.u32 %v462, 7
        %v464 = vsub.s32 1, %v463
        %v465 = vrot.slane %v413, %v464
        %v466 = vmul.f32 %v461, %v418
        %v467 = vmul.f32 %v465, %v418
        %v468 = vsub.f32 %v456, %v466
        %v469 = vsub.f32 %v457, %v467
        %v470 = vmul.f32 %v451, %v418
        %v471 = vmul.f32 %v455, %v418
        %v472 = vmul.f32 %v461, %v415
        %v473 = vmul.f32 %v465, %v415
        %v474 = vadd.f32 %v470, %v472
        %v475 = vadd.f32 %v471, %v473
        %v476 = vadd.f32 %v440, %v468
        %v477 = vadd.f32 %v441, %v469
        %v478 = vadd.f32 %v446, %v474
        %v479 = vadd.f32 %v447, %v475
        %v480 = vlaneseq
        %v481 = vshrl.u32 %v480, 7
        %v482 = vsub.s32 2, %v481
        %v483 = vrot.slane %v410, %v482
        %v484 = vlaneseq
        %v485 = vshrl.u32 %v484, 7
        %v486 = vsub.s32 2, %v485
        %v487 = vrot.slane %v411, %v486
        %v488 = vmul.f32 %v483, %v416
        %v489 = vmul.f32 %v487, %v416
        %v490 = vlaneseq
        %v491 = vshrl.u32 %v490, 7
        %v492 = vsub.s32 2, %v491
        %v493 = vrot.slane %v412, %v492
        %v494 = vlaneseq
        %v495 = vshrl.u32 %v494, 7
        %v496 = vsub.s32 2, %v495
        %v497 = vrot.slane %v413, %v496
        %v498 = vmul.f32 %v493, %v419
        %v499 = vmul.f32 %v497, %v419
        %v500 = vsub.f32 %v488, %v498
        %v501 = vsub.f32 %v489, %v499
        %v502 = vmul.f32 %v483, %v419
        %v503 = vmul.f32 %v487, %v419
        %v504 = vmul.f32 %v493, %v416
        %v505 = vmul.f32 %v497, %v416
        %v506 = vadd.f32 %v502, %v504
        %v507 = vadd.f32 %v503, %v505
        %v508 = vadd.f32 %v476, %v500
        %v509 = vadd.f32 %v477, %v501
        %v510 = vadd.f32 %v478, %v506
        %v511 = vadd.f32 %v479, %v507
        %vm512 = vcmask 59392
        %513 = vst.msk [vmem:[%s389] sm:$0x7] %vm512, %v508
        %514 = vst.msk [vmem:[%s389 + $0x4] sm:$0x7] %vm512, %v509
        %515 = vst.msk [vmem:[%s395] sm:$0x7] %vm512, %v510
        %516 = vst.msk [vmem:[%s395 + $0x4] sm:$0x7] %vm512, %v511
        %s517 = sand.u32 %s147, 1
        %s518 = sand.u32 %s147, 1
        %s519 = smul.addr %s518, 8
        %s520 = scalar_lea.vmem [#allocation4], %s519
        %s521 = sand.u32 %s175, 1
        %s522 = sand.u32 %s175, 1
        %s523 = smul.addr %s522, 8
        %s524 = scalar_lea.vmem [#allocation5], %s523
        // Predicated region
        $region119: #{group_spectral_conv1d.1} parent=109 // pred_check
          %p525 = pneg %p157
        $region120: #{group_spectral_conv1d.1} parent=109 // pred_check_branch
          %527 = sbr.rel (%p525) target = $region122
        $region121: #{group_spectral_conv1d.1} parent=109 // pred_region
          %s528 = smul.u32 2, %s22
          %s529 = smul.addr %s528, 3
          %s530 = sadd.s32 %s21, %s529
          %s531 = smul.addr %s530, 4
          %s532 = scalar_lea.vmem %s4, %s531
          // Predicated region
          $region123: #{group_spectral_conv1d.1} parent=121 // pred_check
            _
          $region124: #{group_spectral_conv1d.1} parent=121 // pred_check_branch
            %534 = sbr.rel (0) target = $region126
          $region125: #{group_spectral_conv1d.1} parent=121 // pred_region
            // Predicated region
            $region127: #{group_spectral_conv1d.1} parent=125 // pred_check
              _
            $region128: #{group_spectral_conv1d.1} parent=125 // pred_check_branch
              %536 = sbr.rel target = $region130
            $region129: #{group_spectral_conv1d.1} parent=125 // pred_region
              // Predicated region
              $region142: #{group_spectral_conv1d.1} parent=129 // pred_check
                _
              $region143: #{group_spectral_conv1d.1} parent=129 // pred_check_branch
                %554 = sbr.rel (0) target = $region145
              $region144: #{group_spectral_conv1d.1} parent=129 // pred_region
                loop: start=0, step=1, limit=1
                $region146: #{group_spectral_conv1d.1} parent=144 // loop_pre_header
                  _
                $region147: #{group_spectral_conv1d.1} parent=144 // loop_header
                  %s556 = sphi 0, %s560
                  %p557 = scmp.ge.s32.totalorder %s556, 1
                  %s561 = sphi %s520, %s520
                  %s562 = sphi %s532, %s532
                $region148: #{group_spectral_conv1d.1} parent=144 // loop_header_branch
                  %559 = sbr.rel (%p557) target = $region152
                $region149: #{group_spectral_conv1d.1} parent=144 // loop_body
                  _
                $region150: #{group_spectral_conv1d.1} parent=144 // loop_footer
                  %s560 = sadd.s32 1, %s556
                $region151: #{group_spectral_conv1d.1} parent=144 // loop_footer_branch
                  %555 = sbr.rel target = $region147
                $region152: #{group_spectral_conv1d.1} parent=144 // loop_exit
                  _
                %s564 = ssub.s32 16, 1
                loop: start=0, step=1, limit=1
                $region153: #{group_spectral_conv1d.1} parent=144 // loop_pre_header
                  _
                $region154: #{group_spectral_conv1d.1} parent=144 // loop_header
                  %s566 = sphi 0, %s570
                  %p567 = scmp.ge.s32.totalorder %s566, 1
                  %s571 = sphi %s520, %s520
                  %s572 = sphi %s532, %s532
                $region155: #{group_spectral_conv1d.1} parent=144 // loop_header_branch
                  %569 = sbr.rel (%p567) target = $region159
                $region156: #{group_spectral_conv1d.1} parent=144 // loop_body
                  %v573 = vld [vmem:[%s571] sm:%s564]
                  %574 = vst [vmem:[%s572] sm:%s564] %v573
                  %v575 = vld [vmem:[%s571 + $0x4] sm:%s564]
                  %576 = vst [vmem:[%s572 + $0xc] sm:%s564] %v575
                $region157: #{group_spectral_conv1d.1} parent=144 // loop_footer
                  %s570 = sadd.s32 1, %s566
                $region158: #{group_spectral_conv1d.1} parent=144 // loop_footer_branch
                  %565 = sbr.rel target = $region154
                $region159: #{group_spectral_conv1d.1} parent=144 // loop_exit
                  _
              $region145: #{group_spectral_conv1d.1} parent=129 // pred_fallthru
                _
            $region130: #{group_spectral_conv1d.1} parent=125 // pred_fallthru
              _
            // Predicated region
            $region131: #{group_spectral_conv1d.1} parent=125 // pred_check
              _
            $region132: #{group_spectral_conv1d.1} parent=125 // pred_check_branch
              %538 = sbr.rel (0) target = $region134
            $region133: #{group_spectral_conv1d.1} parent=125 // pred_region
              %s540 = ssub.s32 16, 1
              loop: start=0, step=1, limit=1
              $region135: #{group_spectral_conv1d.1} parent=133 // loop_pre_header
                _
              $region136: #{group_spectral_conv1d.1} parent=133 // loop_header
                %s542 = sphi 0, %s546
                %p543 = scmp.ge.s32.totalorder %s542, 1
                %s547 = sphi %s520, %s520
                %s548 = sphi %s532, %s532
              $region137: #{group_spectral_conv1d.1} parent=133 // loop_header_branch
                %545 = sbr.rel (%p543) target = $region141
              $region138: #{group_spectral_conv1d.1} parent=133 // loop_body
                %v549 = vld [vmem:[%s547] sm:%s540]
                %550 = vst [vmem:[%s548] sm:%s540] %v549
                %v551 = vld [vmem:[%s547 + $0x4] sm:%s540]
                %552 = vst [vmem:[%s548 + $0xc] sm:%s540] %v551
              $region139: #{group_spectral_conv1d.1} parent=133 // loop_footer
                %s546 = sadd.s32 1, %s542
              $region140: #{group_spectral_conv1d.1} parent=133 // loop_footer_branch
                %541 = sbr.rel target = $region136
              $region141: #{group_spectral_conv1d.1} parent=133 // loop_exit
                _
            $region134: #{group_spectral_conv1d.1} parent=125 // pred_fallthru
              _
          $region126: #{group_spectral_conv1d.1} parent=121 // pred_fallthru
            _
          %577 = vnop
        $region122: #{group_spectral_conv1d.1} parent=109 // pred_fallthru
          _
        // Predicated region
        $region160: #{group_spectral_conv1d.1} parent=109 // pred_check
          %p578 = pneg %p185
        $region161: #{group_spectral_conv1d.1} parent=109 // pred_check_branch
          %580 = sbr.rel (%p578) target = $region163
        $region162: #{group_spectral_conv1d.1} parent=109 // pred_region
          %s581 = smul.u32 2, %s22
          %s582 = smul.addr %s581, 3
          %s583 = sadd.s32 %s21, %s582
          %s584 = smul.addr %s583, 4
          %s585 = scalar_lea.vmem %s5, %s584
          // Predicated region
          $region164: #{group_spectral_conv1d.1} parent=162 // pred_check
            _
          $region165: #{group_spectral_conv1d.1} parent=162 // pred_check_branch
            %587 = sbr.rel (0) target = $region167
          $region166: #{group_spectral_conv1d.1} parent=162 // pred_region
            // Predicated region
            $region168: #{group_spectral_conv1d.1} parent=166 // pred_check
              _
            $region169: #{group_spectral_conv1d.1} parent=166 // pred_check_branch
              %589 = sbr.rel target = $region171
            $region170: #{group_spectral_conv1d.1} parent=166 // pred_region
              // Predicated region
              $region183: #{group_spectral_conv1d.1} parent=170 // pred_check
                _
              $region184: #{group_spectral_conv1d.1} parent=170 // pred_check_branch
                %607 = sbr.rel (0) target = $region186
              $region185: #{group_spectral_conv1d.1} parent=170 // pred_region
                loop: start=0, step=1, limit=1
                $region187: #{group_spectral_conv1d.1} parent=185 // loop_pre_header
                  _
                $region188: #{group_spectral_conv1d.1} parent=185 // loop_header
                  %s609 = sphi 0, %s613
                  %p610 = scmp.ge.s32.totalorder %s609, 1
                  %s614 = sphi %s524, %s524
                  %s615 = sphi %s585, %s585
                $region189: #{group_spectral_conv1d.1} parent=185 // loop_header_branch
                  %612 = sbr.rel (%p610) target = $region193
                $region190: #{group_spectral_conv1d.1} parent=185 // loop_body
                  _
                $region191: #{group_spectral_conv1d.1} parent=185 // loop_footer
                  %s613 = sadd.s32 1, %s609
                $region192: #{group_spectral_conv1d.1} parent=185 // loop_footer_branch
                  %608 = sbr.rel target = $region188
                $region193: #{group_spectral_conv1d.1} parent=185 // loop_exit
                  _
                %s617 = ssub.s32 16, 1
                loop: start=0, step=1, limit=1
                $region194: #{group_spectral_conv1d.1} parent=185 // loop_pre_header
                  _
                $region195: #{group_spectral_conv1d.1} parent=185 // loop_header
                  %s619 = sphi 0, %s623
                  %p620 = scmp.ge.s32.totalorder %s619, 1
                  %s624 = sphi %s524, %s524
                  %s625 = sphi %s585, %s585
                $region196: #{group_spectral_conv1d.1} parent=185 // loop_header_branch
                  %622 = sbr.rel (%p620) target = $region200
                $region197: #{group_spectral_conv1d.1} parent=185 // loop_body
                  %v626 = vld [vmem:[%s624] sm:%s617]
                  %627 = vst [vmem:[%s625] sm:%s617] %v626
                  %v628 = vld [vmem:[%s624 + $0x4] sm:%s617]
                  %629 = vst [vmem:[%s625 + $0xc] sm:%s617] %v628
                $region198: #{group_spectral_conv1d.1} parent=185 // loop_footer
                  %s623 = sadd.s32 1, %s619
                $region199: #{group_spectral_conv1d.1} parent=185 // loop_footer_branch
                  %618 = sbr.rel target = $region195
                $region200: #{group_spectral_conv1d.1} parent=185 // loop_exit
                  _
              $region186: #{group_spectral_conv1d.1} parent=170 // pred_fallthru
                _
            $region171: #{group_spectral_conv1d.1} parent=166 // pred_fallthru
              _
            // Predicated region
            $region172: #{group_spectral_conv1d.1} parent=166 // pred_check
              _
            $region173: #{group_spectral_conv1d.1} parent=166 // pred_check_branch
              %591 = sbr.rel (0) target = $region175
            $region174: #{group_spectral_conv1d.1} parent=166 // pred_region
              %s593 = ssub.s32 16, 1
              loop: start=0, step=1, limit=1
              $region176: #{group_spectral_conv1d.1} parent=174 // loop_pre_header
                _
              $region177: #{group_spectral_conv1d.1} parent=174 // loop_header
                %s595 = sphi 0, %s599
                %p596 = scmp.ge.s32.totalorder %s595, 1
                %s600 = sphi %s524, %s524
                %s601 = sphi %s585, %s585
              $region178: #{group_spectral_conv1d.1} parent=174 // loop_header_branch
                %598 = sbr.rel (%p596) target = $region182
              $region179: #{group_spectral_conv1d.1} parent=174 // loop_body
                %v602 = vld [vmem:[%s600] sm:%s593]
                %603 = vst [vmem:[%s601] sm:%s593] %v602
                %v604 = vld [vmem:[%s600 + $0x4] sm:%s593]
                %605 = vst [vmem:[%s601 + $0xc] sm:%s593] %v604
              $region180: #{group_spectral_conv1d.1} parent=174 // loop_footer
                %s599 = sadd.s32 1, %s595
              $region181: #{group_spectral_conv1d.1} parent=174 // loop_footer_branch
                %594 = sbr.rel target = $region177
              $region182: #{group_spectral_conv1d.1} parent=174 // loop_exit
                _
            $region175: #{group_spectral_conv1d.1} parent=166 // pred_fallthru
              _
          $region167: #{group_spectral_conv1d.1} parent=162 // pred_fallthru
            _
          %630 = vnop
        $region163: #{group_spectral_conv1d.1} parent=109 // pred_fallthru
          _
      $region110: #{group_spectral_conv1d.1} parent=5 // pred_fallthru
        _
      %p631 = scmp.le.s32.totalorder 2, %s12
      // Predicated region
      $region201: #{group_spectral_conv1d.1} parent=5 // pred_check
        %p632 = pneg %p631
      $region202: #{group_spectral_conv1d.1} parent=5 // pred_check_branch
        %634 = sbr.rel (%p632) target = $region204
      $region203: #{group_spectral_conv1d.1} parent=5 // pred_region
        %s635 = ssub.s32 %s12, 2
        // Predicated region
        $region205: #{group_spectral_conv1d.1} parent=203 // pred_check
          %p636 = pneg %p163
        $region206: #{group_spectral_conv1d.1} parent=203 // pred_check_branch
          %638 = sbr.rel (%p636) target = $region208
        $region207: #{group_spectral_conv1d.1} parent=203 // pred_region
          %s639 = sand.u32 %s148, 1
          %s640 = sand.u32 %s148, 1
          %s641 = smul.addr %s640, 8
          %s642 = scalar_lea.vmem [#allocation4], %s641
        $region208: #{group_spectral_conv1d.1} parent=203 // pred_fallthru
          _
        // Predicated region
        $region209: #{group_spectral_conv1d.1} parent=203 // pred_check
          %p643 = pneg %p191
        $region210: #{group_spectral_conv1d.1} parent=203 // pred_check_branch
          %645 = sbr.rel (%p643) target = $region212
        $region211: #{group_spectral_conv1d.1} parent=203 // pred_region
          %s646 = sand.u32 %s176, 1
          %s647 = sand.u32 %s176, 1
          %s648 = smul.addr %s647, 8
          %s649 = scalar_lea.vmem [#allocation5], %s648
        $region212: #{group_spectral_conv1d.1} parent=203 // pred_fallthru
          _
      $region204: #{group_spectral_conv1d.1} parent=5 // pred_fallthru
        _
    $region6: #{group_spectral_conv1d.1} parent=1 // loop_footer
      %s16 = sadd.s32 1, %s12
    $region7: #{group_spectral_conv1d.1} parent=1 // loop_footer_branch
      %11 = sbr.rel target = $region3
    $region8: #{group_spectral_conv1d.1} parent=1 // loop_exit
      _

</llo_original>
